<compile_context>
chip_gen: v7x
topology: tpu7x:2x2x1
jax: 0.10.0
libtpu: 0.0.40
codegen_flags: <defaults>
</compile_context>

<pallas_src>
import jax
import jax.numpy as jnp
from jax.experimental import pallas as pl
from jax.experimental.pallas import tpu as pltpu

EPS = 1e-12  # F.normalize default eps


def _l2norm_kernel(x_ref, o_ref):
    # Block: (bn, C, T_HW).  Normalize along axis=1 (channels).
    x = x_ref[...]
    xf = x.astype(jnp.float32)
    ss = jnp.sum(xf * xf, axis=1, keepdims=True)            # (bn, 1, T_HW) f32
    # max(sqrt(ss), EPS) == sqrt(max(ss, EPS^2)); rsqrt keeps EUP work to one
    # op per spatial element instead of C divides per element.
    inv = jax.lax.rsqrt(jnp.maximum(ss, EPS * EPS))          # (bn, 1, T_HW) f32
    # Apply the scale in the input dtype (avoids a second live f32 copy of the
    # whole block for bf16 inputs; <=1 ulp extra rounding of inv).
    o_ref[...] = (x * inv.astype(x.dtype)).astype(o_ref.dtype)


def _vmem_limit_and_budget():
    """Generation-aware scoped-VMEM limit and per-input-block byte budget."""
    phys = 128 * 1024 * 1024
    try:
        info = pltpu.get_tpu_info()
        phys = int(getattr(info, "vmem_capacity_bytes", phys))
    except Exception:
        pass
    # 64 MiB on v5e/v6e (128 MiB physical), ~40 MiB on v7x (64 MiB physical).
    vmem_limit = min(phys * 5 // 8, 64 * 1024 * 1024)
    # Double-buffered in + out (~4x block) plus kernel temporaries must fit.
    budget = min(vmem_limit // 8, 8 * 1024 * 1024)
    return vmem_limit, budget


def _choose_tiles(n, c, hw, itemsize, budget_bytes):
    """Pick (bn, t_hw): images per block and lane-aligned HW tile."""
    # HW tile: lane-aligned (or full extent if HW <= 128), sized by the byte
    # budget, never larger than the 128-rounded full HW extent.
    if hw <= 128:
        t_hw = hw
    else:
        hw_ceil = pl.cdiv(hw, 128) * 128
        max_lanes = max(128, (budget_bytes // max(1, c * itemsize)) // 128 * 128)
        t_hw = min(hw_ceil, max_lanes)
    hw_tiles = pl.cdiv(hw, t_hw)

    # Batch several images per block when one image's (C, t_hw) slab is far
    # below the budget (small C and/or small HW).
    block_bytes = c * t_hw * itemsize
    bn = max(1, min(n, budget_bytes // max(1, block_bytes)))
    n_tiles = pl.cdiv(n, bn)

    # Guarantee >= 2 grid steps on a "parallel" axis when possible, so v7x's
    # two TensorCores both get work (no effect on v5e/v6e).
    if n_tiles * hw_tiles < 2:
        if t_hw > 128:
            t_hw = max(128, pl.cdiv(pl.cdiv(hw, 2), 128) * 128)
            hw_tiles = pl.cdiv(hw, t_hw)
        if n_tiles * hw_tiles < 2 and bn > 1:
            bn = pl.cdiv(n, 2)
            n_tiles = pl.cdiv(n, bn)
    return bn, t_hw


def l2norm(x):
    """L2-normalize an NCHW tensor along dim=1 (channels)."""
    n, c, h, w = x.shape
    hw = h * w
    itemsize = jnp.dtype(x.dtype).itemsize

    vmem_limit, budget = _vmem_limit_and_budget()
    bn, t_hw = _choose_tiles(n, c, hw, itemsize, budget)

    x2 = x.reshape(n, c, hw)
    grid = (pl.cdiv(n, bn), pl.cdiv(hw, t_hw))

    cost = pl.CostEstimate(
        flops=3 * n * c * hw,
        transcendentals=n * hw,
        bytes_accessed=2 * n * c * hw * itemsize,
    )

    out = pl.pallas_call(
        _l2norm_kernel,
        out_shape=jax.ShapeDtypeStruct((n, c, hw), x.dtype),
        grid_spec=pl.GridSpec(
            grid=grid,
            in_specs=[pl.BlockSpec((bn, c, t_hw), lambda i, j: (i, 0, j))],
            out_specs=pl.BlockSpec((bn, c, t_hw), lambda i, j: (i, 0, j)),
        ),
        compiler_params=pltpu.CompilerParams(
            dimension_semantics=("parallel", "parallel"),
            vmem_limit_bytes=int(vmem_limit),
        ),
        cost_estimate=cost,
    )(x2)

    return out.reshape(n, c, h, w)


def _reference(x):
    # Pure-JAX mirror of torch.nn.functional.normalize(p=2, dim=1).
    norm = jnp.sqrt(jnp.sum(x.astype(jnp.float32) ** 2, axis=1, keepdims=True))
    return (x / jnp.maximum(norm, EPS)).astype(x.dtype)


if __name__ == "__main__":
    key = jax.random.PRNGKey(0)
    x = jax.random.normal(key, (2, 4, 16, 16), dtype=jnp.float32)

    y = l2norm(x)
    jax.block_until_ready(y)

    y_ref = _reference(x)
    assert y.shape == x.shape and y.dtype == x.dtype
    assert jnp.allclose(y, y_ref, atol=1e-5, rtol=1e-5)

    print("KERNEL_OK")
</pallas_src>

<mosaic_0001>
module attributes {stable_mosaic.version = 11 : i64} {
  func.func @_l2norm_kernel(%arg0: i32, %arg1: i32, %arg2: memref<2x4x128xf32, #tpu.memory_space<vmem>>, %arg3: memref<2x4x128xf32, #tpu.memory_space<vmem>>) attributes {dimension_semantics = [#tpu.dimension_semantics<parallel>, #tpu.dimension_semantics<parallel>], iteration_bounds = array<i64: 1, 2>, scalar_prefetch = 0 : i64, scratch_operands = 0 : i64, tpu.core_type = #tpu.core_type<tc>, window_params = [{transform_indices = @transform_0, window_bounds = array<i64: 2, 4, 128>}, {transform_indices = @transform_1, window_bounds = array<i64: 2, 4, 128>}]} {
    %c0 = arith.constant 0 : index
    %c0_0 = arith.constant 0 : index
    %c0_1 = arith.constant 0 : index
    %0 = vector.load %arg2[%c0, %c0_0, %c0_1] : memref<2x4x128xf32, #tpu.memory_space<vmem>>, vector<2x4x128xf32>
    %1 = arith.mulf %0, %0 : vector<2x4x128xf32>
    %cst = arith.constant dense<0.000000e+00> : vector<2x128xf32>
    %2 = vector.multi_reduction <add>, %1, %cst [1] : vector<2x4x128xf32> to vector<2x128xf32>
    %3 = vector.shape_cast %2 : vector<2x128xf32> to vector<2x1x128xf32>
    %cst_2 = arith.constant 1.000000e-24 : f32
    %4 = vector.broadcast %cst_2 : f32 to vector<2x1x128xf32>
    %5 = arith.maximumf %3, %4 : vector<2x1x128xf32>
    %6 = math.rsqrt %5 : vector<2x1x128xf32>
    %7 = vector.broadcast %6 : vector<2x1x128xf32> to vector<2x4x128xf32>
    %8 = arith.mulf %0, %7 : vector<2x4x128xf32>
    %c0_3 = arith.constant 0 : index
    %c0_4 = arith.constant 0 : index
    %c0_5 = arith.constant 0 : index
    %9 = vector.load %arg3[%c0_3, %c0_4, %c0_5] : memref<2x4x128xf32, #tpu.memory_space<vmem>>, vector<2x4x128xf32>
    tpu.vector_store %arg3[%c0_3, %c0_4, %c0_5], %8 {strides = array<i32>} : memref<2x4x128xf32, #tpu.memory_space<vmem>>, vector<2x4x128xf32>,
    return
  }
  func.func @transform_0(%arg0: i32, %arg1: i32) -> (i32, i32, i32) {
    %c0_i32 = arith.constant 0 : i32
    %c0_i32_0 = arith.constant 0 : i32
    return %arg0, %c0_i32, %arg1 : i32, i32, i32
  }
  func.func @transform_1(%arg0: i32, %arg1: i32) -> (i32, i32, i32) {
    %c0_i32 = arith.constant 0 : i32
    %c0_i32_0 = arith.constant 0 : i32
    return %arg0, %c0_i32, %arg1 : i32, i32, i32
  }
}

</mosaic_0001>

<llo_original>
// kernel: tpu_custom_call.1
$region0: #{tpu_custom_call.1}
  #allocation0 [shape = 'u32[]', space=smem, size = 0x4, offset = 0x4, fixed_abs, tag = 'smem constant byte address 0x4 - core index']
  #allocation1 [shape = 'u32[144,128]{1,0:T(1,128)}', space=vmem, size = 0x12000, scoped, tag = 'internal scratch']
  %s0 = inlined_call_operand.hbm [shape: f32[2,4,256], index: 0, kind: input, shape index: {}]
  %s1 = inlined_call_operand.hbm [shape: f32[2,4,256], index: 1, kind: output, shape index: {}]
  %s2 = sld [smem:[#allocation0]]
  $region41: #{tpu_custom_call.1} parent=0
    _
  %s4 = ssub.s32 1, %s2
  %s5 = scalar_select 0, %s4, %s2
  $region1: #{tpu_custom_call.1} parent=0
    #allocation2 [shape = 'u8[8192]{0}', space=vmem, size = 0x2000, scoped, tag = 'input window, operand 0']
    #allocation3 [shape = 's32[2]{0}', space=sflag, size = 0x8, scoped, tag = 'scoped memory for tpu_custom_call.1']
    #allocation4 [shape = 's32[2]{0}', space=sflag, size = 0x8, scoped, tag = 'scoped memory for tpu_custom_call.1']
    #allocation5 [shape = 'u8[8192]{0}', space=vmem, size = 0x2000, scoped, tag = 'output window, operand 0']
    %6 = vsyncpa [#allocation3], 0
    %s7 = scalar_lea.sflag [#allocation3], 1
    %8 = vsyncpa %s7, 0
    %9 = vsyncpa [#allocation4], 0
    %s10 = scalar_lea.sflag [#allocation4], 1
    %11 = vsyncpa %s10, 0
    loop: start=0, step=1, limit=4
    $region2: #{tpu_custom_call.1} parent=1 // loop_pre_header
      _
    $region3: #{tpu_custom_call.1} parent=1 // loop_header
      %s13 = sphi 0, %s17
      %p14 = scmp.ge.s32.totalorder %s13, 4
      %s20 = sphi 0, %s32
      %s21 = sphi 0, %s28
      %s22 = sphi 0, %s20
      %s23 = sphi 0, %s21
      %s24 = sphi 0, %s22
      %s25 = sphi 0, %s23
      %s37 = sphi 0, %s39
      %s40 = sphi 0, %s37
      %s41 = sphi 0, %s40
      %s57 = sphi 0, %s41
      %s65 = sphi 0, %s67
      %s68 = sphi 0, %s65
      %s69 = sphi 0, %s68
      %s85 = sphi 0, %s69
    $region4: #{tpu_custom_call.1} parent=1 // loop_header_branch
      %16 = sbr.rel (%p14) target = $region8
    $region5: #{tpu_custom_call.1} parent=1 // loop_body
      %s18 = ssub.s32 %s13, 1
      %s19 = ssub.s32 %s13, 2
      %s26 = sadd.s32 1, %s21
      %p27 = scmp.ge.s32.totalorder %s26, 2
      %s28 = scalar_select %p27, 0, %s26
      %s29 = sadd.s32 1, %s20
      %s30 = scalar_select %p27, %s29, %s20
      %p31 = scmp.ge.s32.totalorder %s30, 1
      %s32 = scalar_select %p31, 0, %s30
      %s33 = ssub.s32 %s20, %s32
      %s34 = ssub.s32 %s21, %s28
      %s35 = sor.u32 %s33, %s34
      %p36 = scmp.eq.s32.totalorder %s35, 0
      %s38 = sadd.s32 %s37, 1
      %s39 = scalar_select %p36, %s37, %s38
      %p42 = pneg %p36
      %p43 = scmp.eq.s32.totalorder %s13, 1
      %p44 = por %p42, %p43
      %p45 = scmp.ne.s32.totalorder %s37, %s40
      %p46 = scmp.eq.s32.totalorder %s13, 0
      %p47 = por %p45, %p46
      %p48 = scmp.ne.s32.totalorder %s37, %s40
      %p49 = scmp.eq.s32.totalorder %s18, 1
      %p50 = por %p48, %p49
      %p51 = scmp.ne.s32.totalorder %s40, %s41
      %p52 = scmp.eq.s32.totalorder %s18, 0
      %p53 = por %p51, %p52
      %p54 = scmp.ne.s32.totalorder %s40, %s41
      %p55 = scmp.eq.s32.totalorder %s19, 1
      %p56 = por %p54, %p55
      %p58 = scmp.ne.s32.totalorder %s41, %s57
      %p59 = scmp.eq.s32.totalorder %s19, 0
      %p60 = por %p58, %p59
      %s61 = ssub.s32 %s20, %s32
      %s62 = ssub.s32 %s21, %s28
      %s63 = sor.u32 %s61, %s62
      %p64 = scmp.eq.s32.totalorder %s63, 0
      %s66 = sadd.s32 %s65, 1
      %s67 = scalar_select %p64, %s65, %s66
      %p70 = pneg %p64
      %p71 = scmp.eq.s32.totalorder %s13, 1
      %p72 = por %p70, %p71
      %p73 = scmp.ne.s32.totalorder %s65, %s68
      %p74 = scmp.eq.s32.totalorder %s13, 0
      %p75 = por %p73, %p74
      %p76 = scmp.ne.s32.totalorder %s65, %s68
      %p77 = scmp.eq.s32.totalorder %s18, 1
      %p78 = por %p76, %p77
      %p79 = scmp.ne.s32.totalorder %s68, %s69
      %p80 = scmp.eq.s32.totalorder %s18, 0
      %p81 = por %p79, %p80
      %p82 = scmp.ne.s32.totalorder %s68, %s69
      %p83 = scmp.eq.s32.totalorder %s19, 1
      %p84 = por %p82, %p83
      %p86 = scmp.ne.s32.totalorder %s69, %s85
      %p87 = scmp.eq.s32.totalorder %s19, 0
      %p88 = por %p86, %p87
      %p89 = scmp.le.s32.totalorder 1, %s13
      %p90 = scmp.lt.s32.totalorder %s13, 3
      %p91 = pnand %p89, %p90
      %p92 = pneg %p91
      // Predicated region
      $region9: #{tpu_custom_call.1} parent=5 // pred_check
        _
      $region10: #{tpu_custom_call.1} parent=5 // pred_check_branch
        %94 = sbr.rel (%p91) target = $region12
      $region11: #{tpu_custom_call.1} parent=5 // pred_region
        %s95 = ssub.s32 %s13, 1
      $region12: #{tpu_custom_call.1} parent=5 // pred_fallthru
        _
      %p96 = scmp.lt.s32.totalorder %s13, 2
      // Predicated region
      $region13: #{tpu_custom_call.1} parent=5 // pred_check
        %p97 = pneg %p96
      $region14: #{tpu_custom_call.1} parent=5 // pred_check_branch
        %99 = sbr.rel (%p97) target = $region16
      $region15: #{tpu_custom_call.1} parent=5 // pred_region
        // Predicated region
        $region17: #{tpu_custom_call.1} parent=15 // pred_check
          %p100 = pneg %p47
        $region18: #{tpu_custom_call.1} parent=15 // pred_check_branch
          %102 = sbr.rel (%p100) target = $region20
        $region19: #{tpu_custom_call.1} parent=15 // pred_region
          %s103 = sand.u32 %s37, 1
          %s104 = scalar_lea.sflag [#allocation3], %s103
          %s105 = sand.u32 %s37, 1
          %s106 = smul.addr %s105, 8
          %s107 = scalar_lea.vmem [#allocation2], %s106
          %s108 = smul.u32 2, %s20
          %s110 = ssub.s32 128, 128
          %111 = vsyncadd %s104, %s110
          %s112 = smul.addr %s108, 2
          %s113 = sadd.s32 %s21, %s112
          %s114 = smul.addr %s113, 64
          %s115 = scalar_lea.hbm %s0, %s114
          %s116 = sshll.u32 %s107, 4
          %s117 = int_to_ptr.vmem [resolvable:$true] %s116
          %122 = dma.hbm_to_vmem [thread:$0]  %s115, 128, %s117, %s104, 128, 64, 4
        $region20: #{tpu_custom_call.1} parent=15 // pred_fallthru
          _
      $region16: #{tpu_custom_call.1} parent=5 // pred_fallthru
        _
      %p123 = scmp.le.s32.totalorder 1, %s13
      %p124 = scmp.lt.s32.totalorder %s13, 3
      %p125 = pnand %p123, %p124
      %p126 = pneg %p125
      // Predicated region
      $region21: #{tpu_custom_call.1} parent=5 // pred_check
        _
      $region22: #{tpu_custom_call.1} parent=5 // pred_check_branch
        %128 = sbr.rel (%p125) target = $region24
      $region23: #{tpu_custom_call.1} parent=5 // pred_region
        %s129 = ssub.s32 %s13, 1
        %s130 = sand.u32 %s40, 1
        %s131 = scalar_lea.sflag [#allocation3], %s130
        %s132 = sand.u32 %s40, 1
        %s133 = smul.addr %s132, 8
        %s134 = scalar_lea.vmem [#allocation2], %s133
        // Predicated region
        $region25: #{tpu_custom_call.1} parent=23 // pred_check
          %p135 = pneg %p53
        $region26: #{tpu_custom_call.1} parent=23 // pred_check_branch
          %137 = sbr.rel (%p135) target = $region28
        $region27: #{tpu_custom_call.1} parent=23 // pred_region
          %138 = dma.done %s131, 128
        $region28: #{tpu_custom_call.1} parent=23 // pred_fallthru
          _
        %s139 = sand.u32 %s40, 1
        %s140 = scalar_lea.sflag [#allocation3], %s139
        %s141 = sand.u32 %s40, 1
        %s142 = smul.addr %s141, 8
        %s143 = scalar_lea.vmem [#allocation2], %s142
        %p144 = pneg %p53
        %p145 = pneg %p50
        %p146 = pneg %p81
        %p147 = pneg %p78
        %s148 = sand.u32 %s68, 1
        %s149 = scalar_lea.sflag [#allocation4], %s148
        %s150 = sand.u32 %s68, 1
        %s151 = smul.addr %s150, 8
        %s152 = scalar_lea.vmem [#allocation5], %s151
        %s153 = smul.u32 2, %s22
        %s154 = smul.u32 2, %s22
        %v155 = vld [vmem:[%s134] sm:$0xf]
        %v156 = vld [vmem:[%s134 + $0x4] sm:$0xf]
        %v157 = vmul.f32 %v155, %v155
        %v158 = vmul.f32 %v156, %v156
        %vm159 = vcmask 1043456
        %v160 = vsel %vm159, %v157, 0.0
        %v161 = vrot.slane %v160, 4
        %v162 = vadd.f32 %v160, %v161
        %v163 = vrot.slane %v162, 2
        %v164 = vadd.f32 %v162, %v163
        %v165 = vrot.slane %v164, 1
        %v166 = vadd.f32 %v164, %v165
        %v167 = vsel %vm159, %v158, 0.0
        %v168 = vrot.slane %v167, 4
        %v169 = vadd.f32 %v167, %v168
        %v170 = vrot.slane %v169, 2
        %v171 = vadd.f32 %v169, %v170
        %v172 = vrot.slane %v171, 1
        %v173 = vadd.f32 %v171, %v172
        %v174 = vmax.f32 %v166, 1e-24
        %v175 = vmax.f32 %v173, 1e-24
        %v176 = vrsqrt.pop %v174
        %v177 = vrsqrt.pop %v175
        %v178 = vmul.f32 %v155, %v176
        %v179 = vmul.f32 %v156, %v177
        %180 = vst [vmem:[%s152] sm:$0xf] %v178
        %181 = vst [vmem:[%s152 + $0x4] sm:$0xf] %v179
        %s182 = sand.u32 %s68, 1
        %s183 = scalar_lea.sflag [#allocation4], %s182
        %s184 = sand.u32 %s68, 1
        %s185 = smul.addr %s184, 8
        %s186 = scalar_lea.vmem [#allocation5], %s185
        // Predicated region
        $region29: #{tpu_custom_call.1} parent=23 // pred_check
          %p187 = pneg %p78
        $region30: #{tpu_custom_call.1} parent=23 // pred_check_branch
          %189 = sbr.rel (%p187) target = $region32
        $region31: #{tpu_custom_call.1} parent=23 // pred_region
          %s190 = smul.u32 2, %s22
          %s192 = ssub.s32 128, 128
          %193 = vsyncadd %s183, %s192
          %s194 = smul.addr %s190, 2
          %s195 = sadd.s32 %s23, %s194
          %s196 = smul.addr %s195, 64
          %s197 = scalar_lea.hbm %s1, %s196
          %s198 = sshll.u32 %s186, 4
          %s199 = int_to_ptr.vmem [resolvable:$true] %s198
          %204 = dma.vmem_to_hbm [thread:$0]  %s199, 128, %s197, %s183, 64, 128, 4
        $region32: #{tpu_custom_call.1} parent=23 // pred_fallthru
          _
      $region24: #{tpu_custom_call.1} parent=5 // pred_fallthru
        _
      %p205 = scmp.le.s32.totalorder 2, %s13
      // Predicated region
      $region33: #{tpu_custom_call.1} parent=5 // pred_check
        %p206 = pneg %p205
      $region34: #{tpu_custom_call.1} parent=5 // pred_check_branch
        %208 = sbr.rel (%p206) target = $region36
      $region35: #{tpu_custom_call.1} parent=5 // pred_region
        %s209 = ssub.s32 %s13, 2
        // Predicated region
        $region37: #{tpu_custom_call.1} parent=35 // pred_check
          %p210 = pneg %p84
        $region38: #{tpu_custom_call.1} parent=35 // pred_check_branch
          %212 = sbr.rel (%p210) target = $region40
        $region39: #{tpu_custom_call.1} parent=35 // pred_region
          %s213 = sand.u32 %s69, 1
          %s214 = scalar_lea.sflag [#allocation4], %s213
          %s215 = sand.u32 %s69, 1
          %s216 = smul.addr %s215, 8
          %s217 = scalar_lea.vmem [#allocation5], %s216
          %218 = dma.done %s214, 128
        $region40: #{tpu_custom_call.1} parent=35 // pred_fallthru
          _
      $region36: #{tpu_custom_call.1} parent=5 // pred_fallthru
        _
    $region6: #{tpu_custom_call.1} parent=1 // loop_footer
      %s17 = sadd.s32 1, %s13
    $region7: #{tpu_custom_call.1} parent=1 // loop_footer_branch
      %12 = sbr.rel target = $region3
    $region8: #{tpu_custom_call.1} parent=1 // loop_exit
      _
    %219 = vsyncpa [#allocation3], 1
    %s220 = scalar_lea.sflag [#allocation3], 1
    %221 = vsyncpa %s220, 1
    %222 = vsyncpa [#allocation4], 1
    %s223 = scalar_lea.sflag [#allocation4], 1
    %224 = vsyncpa %s223, 1

</llo_original>
